<compile_context>
chip_gen: v7x
topology: tpu7x:2x2x1
jax: 0.10.0
libtpu: 0.0.40
codegen_flags: <defaults>
</compile_context>

<pallas_src>
import functools

import jax
import jax.numpy as jnp
from jax.experimental import pallas as pl
from jax.experimental.pallas import tpu as pltpu


_LANE = 128


def _round_up(x: int, m: int) -> int:
    return ((x + m - 1) // m) * m


def _sublane_multiple(dtype) -> int:
    # 8 rows per vreg sublane group at 32-bit; sub-32-bit dtypes pack rows.
    itemsize = jnp.dtype(dtype).itemsize
    return 8 * max(1, 4 // max(1, itemsize))


def _bn_act_kernel(x_ref, sb_ref, o_ref, *, params_on_rows: bool):
    """y = relu(x * scale + bias); scale/bias packed in sb_ref."""
    x = x_ref[...].astype(jnp.float32)
    if params_on_rows:
        scale = sb_ref[:, 0:1]      # (tile_rows, 1), broadcast along lanes
        bias = sb_ref[:, 1:2]
    else:
        scale = sb_ref[0:1, :]      # (1, tile_cols), broadcast along sublanes
        bias = sb_ref[1:2, :]
    y = x * scale + bias
    o_ref[...] = jnp.maximum(y, 0.0).astype(o_ref.dtype)   # ReLU; drop=Identity


def _choose_tiles(rows: int, cols: int, itemsize: int,
                  target_bytes: int, sub: int):
    """Pick (tile_rows, tile_cols) whose PADDED footprint fits target_bytes."""

    def padded(r, c):
        return _round_up(r, sub) * _round_up(c, _LANE) * itemsize

    if padded(sub, cols) <= target_bytes or cols <= _LANE:
        # Full-width rows (lane dense, one col block); tile along rows.
        tile_cols = cols
        row_bytes = _round_up(cols, _LANE) * itemsize
        max_rows = max(sub, (target_bytes // row_bytes) // sub * sub)
        tile_rows = min(rows, max_rows)
    else:
        # Even one sublane group of rows is too wide: tile the lane axis too.
        tile_rows = min(rows, sub)
        col_bytes = _round_up(tile_rows, sub) * itemsize
        max_cols = max(_LANE, (target_bytes // col_bytes) // _LANE * _LANE)
        tile_cols = min(cols, max_cols)

    # Never return a single-block grid when the tensor is splittable: give the
    # "parallel" axes >= 2 blocks so v7x can shard across its 2 TensorCores.
    if pl.cdiv(rows, tile_rows) * pl.cdiv(cols, tile_cols) < 2:
        if rows > sub:
            tile_rows = _round_up(pl.cdiv(rows, 2), sub)
        elif cols > _LANE:
            tile_cols = _round_up(pl.cdiv(cols, 2), _LANE)

    return tile_rows, tile_cols


@functools.partial(jax.jit, static_argnames=("eps", "target_tile_bytes"))
def frozen_batch_norm_act_2d(
    x_nchw: jax.Array,
    weight: jax.Array,
    bias: jax.Array,
    running_mean: jax.Array,
    running_var: jax.Array,
    eps: float = 1e-5,
    target_tile_bytes: int = 8 * 1024 * 1024,
) -> jax.Array:
    """Frozen BN + ReLU. Input/output are NCHW (PyTorch convention)."""
    N, C, H, W = x_nchw.shape
    hw = H * W
    itemsize = jnp.dtype(x_nchw.dtype).itemsize
    sub = _sublane_multiple(x_nchw.dtype)

    # Fold frozen stats into a per-channel affine (f32, tiny glue in JAX).
    scale_c = weight.astype(jnp.float32) * jax.lax.rsqrt(
        running_var.astype(jnp.float32) + eps)                      # (C,)
    bias_c = bias.astype(jnp.float32) - running_mean.astype(jnp.float32) * scale_c

    # Layout selection (pure reshapes, no transposes / data movement):
    #   hw >= 128: rows = (n, c) flattened, lanes = spatial  -> per-row params
    #   hw <  128: rows = n, lanes = (c, spatial) flattened  -> per-lane params
    params_on_rows = hw >= _LANE
    if params_on_rows:
        rows, cols = N * C, hw
        x2 = x_nchw.reshape(rows, cols)
        sb = jnp.stack([jnp.tile(scale_c, N), jnp.tile(bias_c, N)], axis=1)  # (rows, 2)
    else:
        rows, cols = N, C * hw
        x2 = x_nchw.reshape(rows, cols)
        sb = jnp.stack([jnp.repeat(scale_c, hw), jnp.repeat(bias_c, hw)], axis=0)  # (2, cols)

    target = max(1 << 20, min(int(target_tile_bytes), 11 * 1024 * 1024))
    tile_rows, tile_cols = _choose_tiles(rows, cols, itemsize, target, sub)
    grid = (pl.cdiv(rows, tile_rows), pl.cdiv(cols, tile_cols))

    # VMEM budget from PADDED tile footprints, double-buffered in/out/params.
    x_tile_b = _round_up(tile_rows, sub) * _round_up(tile_cols, _LANE) * itemsize
    if params_on_rows:
        sb_block = (tile_rows, 2)
        sb_map = lambda i, j: (i, 0)
        sb_tile_b = _round_up(tile_rows, 8) * _LANE * 4
    else:
        sb_block = (2, tile_cols)
        sb_map = lambda i, j: (0, j)
        sb_tile_b = 8 * _round_up(tile_cols, _LANE) * 4
    vmem_limit = int(1.2 * 2 * (2 * x_tile_b + sb_tile_b)) + (1 << 20)
    vmem_limit = min(48 * 1024 * 1024, max(vmem_limit, 16 * 1024 * 1024))

    cost = pl.CostEstimate(
        flops=int(3 * rows * cols),                 # mul + add + max
        transcendentals=0,
        bytes_accessed=int(2 * rows * cols * itemsize + sb.size * 4),
    )

    kernel = functools.partial(_bn_act_kernel, params_on_rows=params_on_rows)

    out2 = pl.pallas_call(
        kernel,
        out_shape=jax.ShapeDtypeStruct((rows, cols), x2.dtype),
        grid_spec=pltpu.PrefetchScalarGridSpec(
            num_scalar_prefetch=0,
            grid=grid,
            in_specs=[
                pl.BlockSpec((tile_rows, tile_cols), lambda i, j: (i, j)),
                pl.BlockSpec(sb_block, sb_map),
            ],
            out_specs=pl.BlockSpec((tile_rows, tile_cols), lambda i, j: (i, j)),
        ),
        compiler_params=pltpu.CompilerParams(
            dimension_semantics=("parallel", "parallel"),
            vmem_limit_bytes=vmem_limit,
        ),
        cost_estimate=cost,
    )(x2, sb)

    return out2.reshape(N, C, H, W)


if __name__ == "__main__":
    key = jax.random.PRNGKey(0)
    k_x, k_w, k_b, k_rm, k_rv, k_x2 = jax.random.split(key, 6)

    eps = 1e-5

    def reference(x, w, b, rm, rv):
        scale = (w * jax.lax.rsqrt(rv + eps)).reshape(1, -1, 1, 1)
        bias_f = b.reshape(1, -1, 1, 1) - rm.reshape(1, -1, 1, 1) * scale
        return jnp.maximum(x * scale + bias_f, 0.0)

    # Case 1: hw >= 128 -> row-broadcast (sublane) parameter layout.
    N, C, H, W = 2, 4, 16, 16
    x = jax.random.normal(k_x, (N, C, H, W), dtype=jnp.float32)
    weight = 1.0 + 0.1 * jax.random.normal(k_w, (C,), dtype=jnp.float32)
    bias = 0.1 * jax.random.normal(k_b, (C,), dtype=jnp.float32)
    running_mean = 0.05 * jax.random.normal(k_rm, (C,), dtype=jnp.float32)
    running_var = 1.0 + 0.1 * jax.random.uniform(k_rv, (C,), dtype=jnp.float32)

    out = frozen_batch_norm_act_2d(x, weight, bias, running_mean, running_var, eps=eps)
    out = jax.block_until_ready(out)
    ref = reference(x, weight, bias, running_mean, running_var)
    assert out.shape == (N, C, H, W)
    assert jnp.allclose(out, ref, atol=1e-5, rtol=1e-5), "mismatch (hw>=128 path)"

    # Case 2: hw < 128 (7x7 late-stage style) -> lane-broadcast parameter layout.
    N2, C2, H2, W2 = 2, 8, 7, 7
    x_s = jax.random.normal(k_x2, (N2, C2, H2, W2), dtype=jnp.float32)
    w2 = 1.0 + 0.1 * jax.random.normal(k_w, (C2,), dtype=jnp.float32)
    b2 = 0.1 * jax.random.normal(k_b, (C2,), dtype=jnp.float32)
    rm2 = 0.05 * jax.random.normal(k_rm, (C2,), dtype=jnp.float32)
    rv2 = 1.0 + 0.1 * jax.random.uniform(k_rv, (C2,), dtype=jnp.float32)

    out_s = jax.block_until_ready(
        frozen_batch_norm_act_2d(x_s, w2, b2, rm2, rv2, eps=eps))
    ref_s = reference(x_s, w2, b2, rm2, rv2)
    assert out_s.shape == (N2, C2, H2, W2)
    assert jnp.allclose(out_s, ref_s, atol=1e-5, rtol=1e-5), "mismatch (hw<128 path)"

    print("KERNEL_OK")
</pallas_src>

<mosaic_0001>
module attributes {stable_mosaic.version = 11 : i64} {
  func.func @_bn_act_kernel(%arg0: i32, %arg1: i32, %arg2: memref<8x128xf32, #tpu.memory_space<vmem>>, %arg3: memref<8x2xf32, #tpu.memory_space<vmem>>, %arg4: memref<8x128xf32, #tpu.memory_space<vmem>>) attributes {dimension_semantics = [#tpu.dimension_semantics<parallel>, #tpu.dimension_semantics<parallel>], iteration_bounds = array<i64: 1, 2>, scalar_prefetch = 0 : i64, scratch_operands = 0 : i64, tpu.core_type = #tpu.core_type<tc>, window_params = [{transform_indices = @transform_0, window_bounds = array<i64: 8, 128>}, {transform_indices = @transform_1, window_bounds = array<i64: 8, 2>}, {transform_indices = @transform_2, window_bounds = array<i64: 8, 128>}]} {
    %c0 = arith.constant 0 : index
    %c0_0 = arith.constant 0 : index
    %0 = vector.load %arg2[%c0, %c0_0] : memref<8x128xf32, #tpu.memory_space<vmem>>, vector<8x128xf32>
    %c0_1 = arith.constant 0 : index
    %c0_2 = arith.constant 0 : index
    %1 = vector.load %arg3[%c0_1, %c0_2] : memref<8x2xf32, #tpu.memory_space<vmem>>, vector<8x1xf32>
    %c0_3 = arith.constant 0 : index
    %c1 = arith.constant 1 : index
    %2 = vector.load %arg3[%c0_3, %c1] : memref<8x2xf32, #tpu.memory_space<vmem>>, vector<8x1xf32>
    %3 = vector.broadcast %1 : vector<8x1xf32> to vector<8x128xf32>
    %4 = arith.mulf %0, %3 : vector<8x128xf32>
    %5 = vector.broadcast %2 : vector<8x1xf32> to vector<8x128xf32>
    %6 = arith.addf %4, %5 : vector<8x128xf32>
    %cst = arith.constant 0.000000e+00 : f32
    %7 = vector.broadcast %cst : f32 to vector<8x128xf32>
    %8 = arith.maximumf %6, %7 : vector<8x128xf32>
    %c0_4 = arith.constant 0 : index
    %c0_5 = arith.constant 0 : index
    %9 = vector.load %arg4[%c0_4, %c0_5] : memref<8x128xf32, #tpu.memory_space<vmem>>, vector<8x128xf32>
    tpu.vector_store %arg4[%c0_4, %c0_5], %8 {strides = array<i32>} : memref<8x128xf32, #tpu.memory_space<vmem>>, vector<8x128xf32>,
    return
  }
  func.func @transform_0(%arg0: i32, %arg1: i32) -> (i32, i32) {
    %c0_i32 = arith.constant 0 : i32
    return %arg0, %arg1 : i32, i32
  }
  func.func @transform_1(%arg0: i32, %arg1: i32) -> (i32, i32) {
    %c0_i32 = arith.constant 0 : i32
    %c0_i32_0 = arith.constant 0 : i32
    return %arg0, %c0_i32 : i32, i32
  }
  func.func @transform_2(%arg0: i32, %arg1: i32) -> (i32, i32) {
    %c0_i32 = arith.constant 0 : i32
    return %arg0, %arg1 : i32, i32
  }
}

</mosaic_0001>

<llo_original>
// kernel: tile.17
$region0: #{tile.17}
  #allocation0 [shape = 's32[1]{0}', space=sflag, size = 0x4, scoped, tag = 'scoped memory for tile.17']
  %s0 = inlined_call_operand.vmem [shape: f32[4], index: 0, kind: input, shape index: {}]
  %s1 = inlined_call_operand.vmem [shape: f32[2,4], index: 1, kind: output, shape index: {}]
  // Predicated region
  $region2: #{tile.17} parent=0 // pred_check
    _
  $region3: #{tile.17} parent=0 // pred_check_branch
    %3 = sbr.rel (0) target = $region5
  $region4: #{tile.17} parent=0 // pred_region
    _
  $region5: #{tile.17} parent=0 // pred_fallthru
    _
  %v4 = vld [vmem:[%s0] ss:$0 sm:$0xff]
  %5 = vst [vmem:[%s1] sm:$0x3] %v4

// kernel: tile.19
$region0: #{tile.19}
  %s0 = inlined_call_operand.vmem [shape: f32[2,4], index: 0, kind: input, shape index: {}]
  %s1 = inlined_call_operand.vmem [shape: f32[8,1], index: 1, kind: output, shape index: {}]
  $region1: #{tile.19} parent=0
    #allocation0 [shape = 'u8[4096]{0}', space=vmem, size = 0x1000, scoped, tag = 'scoped mem for output reshape']
    #allocation1 [shape = 'u8[4096]{0}', space=vmem, size = 0x1000, scoped, tag = 'scoped mem for input reshape']
    %s3 = sshllo.u32 0, 2
    %v4 = vld [vmem:[%s0] sm:%s3]
    %5 = vst [vmem:[#allocation1] sm:%s3] %v4
    %v6 = vld [vmem:[#allocation1] sm:$0x1]
    %vm7 = vcmask 31744
    %8 = vst.msk [vmem:[#allocation0] sm:$0x1] %vm7, %v6
    %s9 = scalar_lea.vmem [#allocation1], 1
    %v10 = vld [vmem:[%s9] sm:$0x1]
    %11 = vrot.lane.b32.xlu0 %v10, 4
    %v12 = vpop.permute.xlu0 %11
    %vm13 = vcmask 64544
    %14 = vst.msk [vmem:[#allocation0] sm:$0x1] %vm13, %v12
    %s16 = sshllo.u32 0, 1
    %v18 = vld [vmem:[#allocation0] sm:%s16]
    %s19 = sshllo.u32 0, 1
    %20 = vst [vmem:[%s1] sm:%s19] %v18

// kernel: frozen_batch_norm_act_2d.1
$region0: #{frozen_batch_norm_act_2d.1}
  #allocation0 [shape = 'u32[]', space=smem, size = 0x4, offset = 0x4, fixed_abs, tag = 'smem constant byte address 0x4 - core index']
  #allocation1 [shape = 'u32[144,128]{1,0:T(1,128)}', space=vmem, size = 0x12000, scoped, tag = 'internal scratch']
  %s0 = inlined_call_operand.vmem [shape: f32[8,256], index: 0, kind: input, shape index: {}]
  %s1 = inlined_call_operand.vmem [shape: f32[8,2], index: 1, kind: input, shape index: {}]
  %s2 = inlined_call_operand.vmem [shape: f32[8,256], index: 2, kind: output, shape index: {}]
  %s3 = sld [smem:[#allocation0]]
  $region41: #{frozen_batch_norm_act_2d.1} parent=0
    _
  %s5 = ssub.s32 1, %s3
  %s6 = scalar_select 0, %s5, %s3
  loop: start=0, step=1, limit=4
  $region2: #{frozen_batch_norm_act_2d.1} parent=0 // loop_pre_header
    _
  $region3: #{frozen_batch_norm_act_2d.1} parent=0 // loop_header
    %s8 = sphi 0, %s12
    %p9 = scmp.ge.s32.totalorder %s8, 4
    %s15 = sphi 0, %s27
    %s16 = sphi 0, %s23
    %s17 = sphi 0, %s15
    %s18 = sphi 0, %s16
    %s19 = sphi 0, %s17
    %s20 = sphi 0, %s18
    %s32 = sphi 0, %s34
    %s35 = sphi 0, %s32
    %s36 = sphi 0, %s35
    %s52 = sphi 0, %s36
    %s58 = sphi 0, %s60
    %s61 = sphi 0, %s58
    %s62 = sphi 0, %s61
    %s78 = sphi 0, %s62
    %s86 = sphi 0, %s88
    %s89 = sphi 0, %s86
    %s90 = sphi 0, %s89
    %s106 = sphi 0, %s90
  $region4: #{frozen_batch_norm_act_2d.1} parent=0 // loop_header_branch
    %11 = sbr.rel (%p9) target = $region8
  $region5: #{frozen_batch_norm_act_2d.1} parent=0 // loop_body
    %s13 = ssub.s32 %s8, 1
    %s14 = ssub.s32 %s8, 2
    %s21 = sadd.s32 1, %s16
    %p22 = scmp.ge.s32.totalorder %s21, 2
    %s23 = scalar_select %p22, 0, %s21
    %s24 = sadd.s32 1, %s15
    %s25 = scalar_select %p22, %s24, %s15
    %p26 = scmp.ge.s32.totalorder %s25, 1
    %s27 = scalar_select %p26, 0, %s25
    %s28 = ssub.s32 %s15, %s27
    %s29 = ssub.s32 %s16, %s23
    %s30 = sor.u32 %s28, %s29
    %p31 = scmp.eq.s32.totalorder %s30, 0
    %s33 = sadd.s32 %s32, 1
    %s34 = scalar_select %p31, %s32, %s33
    %p37 = pneg %p31
    %p38 = scmp.eq.s32.totalorder %s8, 1
    %p39 = por %p37, %p38
    %p40 = scmp.ne.s32.totalorder %s32, %s35
    %p41 = scmp.eq.s32.totalorder %s8, 0
    %p42 = por %p40, %p41
    %p43 = scmp.ne.s32.totalorder %s32, %s35
    %p44 = scmp.eq.s32.totalorder %s13, 1
    %p45 = por %p43, %p44
    %p46 = scmp.ne.s32.totalorder %s35, %s36
    %p47 = scmp.eq.s32.totalorder %s13, 0
    %p48 = por %p46, %p47
    %p49 = scmp.ne.s32.totalorder %s35, %s36
    %p50 = scmp.eq.s32.totalorder %s14, 1
    %p51 = por %p49, %p50
    %p53 = scmp.ne.s32.totalorder %s36, %s52
    %p54 = scmp.eq.s32.totalorder %s14, 0
    %p55 = por %p53, %p54
    %s56 = ssub.s32 %s15, %s27
    %p57 = scmp.eq.s32.totalorder %s56, 0
    %s59 = sadd.s32 %s58, 1
    %s60 = scalar_select %p57, %s58, %s59
    %p63 = pneg %p57
    %p64 = scmp.eq.s32.totalorder %s8, 1
    %p65 = por %p63, %p64
    %p66 = scmp.ne.s32.totalorder %s58, %s61
    %p67 = scmp.eq.s32.totalorder %s8, 0
    %p68 = por %p66, %p67
    %p69 = scmp.ne.s32.totalorder %s58, %s61
    %p70 = scmp.eq.s32.totalorder %s13, 1
    %p71 = por %p69, %p70
    %p72 = scmp.ne.s32.totalorder %s61, %s62
    %p73 = scmp.eq.s32.totalorder %s13, 0
    %p74 = por %p72, %p73
    %p75 = scmp.ne.s32.totalorder %s61, %s62
    %p76 = scmp.eq.s32.totalorder %s14, 1
    %p77 = por %p75, %p76
    %p79 = scmp.ne.s32.totalorder %s62, %s78
    %p80 = scmp.eq.s32.totalorder %s14, 0
    %p81 = por %p79, %p80
    %s82 = ssub.s32 %s15, %s27
    %s83 = ssub.s32 %s16, %s23
    %s84 = sor.u32 %s82, %s83
    %p85 = scmp.eq.s32.totalorder %s84, 0
    %s87 = sadd.s32 %s86, 1
    %s88 = scalar_select %p85, %s86, %s87
    %p91 = pneg %p85
    %p92 = scmp.eq.s32.totalorder %s8, 1
    %p93 = por %p91, %p92
    %p94 = scmp.ne.s32.totalorder %s86, %s89
    %p95 = scmp.eq.s32.totalorder %s8, 0
    %p96 = por %p94, %p95
    %p97 = scmp.ne.s32.totalorder %s86, %s89
    %p98 = scmp.eq.s32.totalorder %s13, 1
    %p99 = por %p97, %p98
    %p100 = scmp.ne.s32.totalorder %s89, %s90
    %p101 = scmp.eq.s32.totalorder %s13, 0
    %p102 = por %p100, %p101
    %p103 = scmp.ne.s32.totalorder %s89, %s90
    %p104 = scmp.eq.s32.totalorder %s14, 1
    %p105 = por %p103, %p104
    %p107 = scmp.ne.s32.totalorder %s90, %s106
    %p108 = scmp.eq.s32.totalorder %s14, 0
    %p109 = por %p107, %p108
    %p110 = scmp.le.s32.totalorder 1, %s8
    %p111 = scmp.lt.s32.totalorder %s8, 3
    %p112 = pnand %p110, %p111
    %p113 = pneg %p112
    // Predicated region
    $region9: #{frozen_batch_norm_act_2d.1} parent=5 // pred_check
      _
    $region10: #{frozen_batch_norm_act_2d.1} parent=5 // pred_check_branch
      %115 = sbr.rel (%p112) target = $region12
    $region11: #{frozen_batch_norm_act_2d.1} parent=5 // pred_region
      %s116 = ssub.s32 %s8, 1
      // Predicated region
      $region13: #{frozen_batch_norm_act_2d.1} parent=11 // pred_check
        %p117 = pneg %p74
      $region14: #{frozen_batch_norm_act_2d.1} parent=11 // pred_check_branch
        %119 = sbr.rel (%p117) target = $region16
      $region15: #{frozen_batch_norm_act_2d.1} parent=11 // pred_region
        %p120 = scmp.lt.s32.totalorder %s17, 0
        %s121 = scalar_select %p120, %s17, 0
        %s122 = smul.addr %s121, 8
        %s123 = scalar_lea.vmem %s1, %s122
      $region16: #{frozen_batch_norm_act_2d.1} parent=11 // pred_fallthru
        _
    $region12: #{frozen_batch_norm_act_2d.1} parent=5 // pred_fallthru
      _
    %p124 = scmp.lt.s32.totalorder %s8, 2
    // Predicated region
    $region17: #{frozen_batch_norm_act_2d.1} parent=5 // pred_check
      %p125 = pneg %p124
    $region18: #{frozen_batch_norm_act_2d.1} parent=5 // pred_check_branch
      %127 = sbr.rel (%p125) target = $region20
    $region19: #{frozen_batch_norm_act_2d.1} parent=5 // pred_region
      // Predicated region
      $region21: #{frozen_batch_norm_act_2d.1} parent=19 // pred_check
        %p128 = pneg %p42
      $region22: #{frozen_batch_norm_act_2d.1} parent=19 // pred_check_branch
        %130 = sbr.rel (%p128) target = $region24
      $region23: #{frozen_batch_norm_act_2d.1} parent=19 // pred_region
        %p131 = scmp.lt.s32.totalorder %s15, 0
        %s132 = scalar_select %p131, %s15, 0
        %p133 = scmp.lt.s32.totalorder %s16, 1
        %s134 = scalar_select %p133, %s16, 1
        %s135 = smul.addr %s132, 2
        %s136 = sadd.s32 %s134, %s135
        %s137 = smul.addr %s136, 8
        %s138 = scalar_lea.vmem %s0, %s137
      $region24: #{frozen_batch_norm_act_2d.1} parent=19 // pred_fallthru
        _
    $region20: #{frozen_batch_norm_act_2d.1} parent=5 // pred_fallthru
      _
    %p139 = scmp.le.s32.totalorder 1, %s8
    %p140 = scmp.lt.s32.totalorder %s8, 3
    %p141 = pnand %p139, %p140
    %p142 = pneg %p141
    // Predicated region
    $region25: #{frozen_batch_norm_act_2d.1} parent=5 // pred_check
      _
    $region26: #{frozen_batch_norm_act_2d.1} parent=5 // pred_check_branch
      %144 = sbr.rel (%p141) target = $region28
    $region27: #{frozen_batch_norm_act_2d.1} parent=5 // pred_region
      %s145 = ssub.s32 %s8, 1
      %p146 = scmp.lt.s32.totalorder %s17, 0
      %s147 = scalar_select %p146, %s17, 0
      %p148 = scmp.lt.s32.totalorder %s18, 1
      %s149 = scalar_select %p148, %s18, 1
      %s150 = smul.addr %s147, 2
      %s151 = sadd.s32 %s149, %s150
      %s152 = smul.addr %s151, 8
      %s153 = scalar_lea.vmem %s0, %s152
      %p154 = pneg %p48
      %p155 = pneg %p45
      %p156 = scmp.lt.s32.totalorder %s17, 0
      %s157 = scalar_select %p156, %s17, 0
      %s158 = smul.addr %s157, 8
      %s159 = scalar_lea.vmem %s1, %s158
      %p160 = pneg %p74
      %p161 = pneg %p71
      %p162 = pneg %p102
      %p163 = pneg %p99
      %p164 = scmp.lt.s32.totalorder %s17, 0
      %s165 = scalar_select %p164, %s17, 0
      %p166 = scmp.lt.s32.totalorder %s18, 1
      %s167 = scalar_select %p166, %s18, 1
      %s168 = smul.addr %s165, 2
      %s169 = sadd.s32 %s167, %s168
      %s170 = smul.addr %s169, 8
      %s171 = scalar_lea.vmem %s2, %s170
      %p172 = scmp.lt.s32.totalorder %s17, 0
      %s173 = scalar_select %p172, %s17, 0
      %p174 = scmp.lt.s32.totalorder %s18, 1
      %s175 = scalar_select %p174, %s18, 1
      %s176 = smul.addr %s173, 2
      %s177 = sadd.s32 %s175, %s176
      %s178 = smul.addr %s177, 8
      %s179 = scalar_lea.vmem %s0, %s178
      %p180 = scmp.lt.s32.totalorder %s17, 0
      %s181 = scalar_select %p180, %s17, 0
      %s182 = smul.addr %s181, 8
      %s183 = scalar_lea.vmem %s1, %s182
      %p184 = scmp.lt.s32.totalorder %s17, 0
      %s185 = scalar_select %p184, %s17, 0
      %p186 = scmp.lt.s32.totalorder %s18, 1
      %s187 = scalar_select %p186, %s18, 1
      %s188 = smul.addr %s185, 2
      %s189 = sadd.s32 %s187, %s188
      %s190 = smul.addr %s189, 8
      %s191 = scalar_lea.vmem %s2, %s190
      %v192 = vld [vmem:[%s179] sm:$0xff]
      %v193 = vld [vmem:[%s183] sm:$0xff]
      %195 = vset.pattern.permute.xlu0 0
      %196 = vperm.xlu0 %195, %v193
      %v197 = vpop.permute.xlu0 %196
      %v199 = vmul.f32 %v192, %v197
      %200 = vset.pattern.permute.xlu0 1
      %201 = vperm.xlu0 %200, %v193
      %v202 = vpop.permute.xlu0 %201
      %v204 = vadd.f32 %v199, %v202
      %v205 = vmax.f32 %v204, 0.0
      %206 = vst [vmem:[%s191] sm:$0xff] %v205
      %p207 = scmp.lt.s32.totalorder %s17, 0
      %s208 = scalar_select %p207, %s17, 0
      %p209 = scmp.lt.s32.totalorder %s18, 1
      %s210 = scalar_select %p209, %s18, 1
      %s211 = smul.addr %s208, 2
      %s212 = sadd.s32 %s210, %s211
      %s213 = smul.addr %s212, 8
      %s214 = scalar_lea.vmem %s2, %s213
      // Predicated region
      $region29: #{frozen_batch_norm_act_2d.1} parent=27 // pred_check
        %p215 = pneg %p99
      $region30: #{frozen_batch_norm_act_2d.1} parent=27 // pred_check_branch
        %217 = sbr.rel (%p215) target = $region32
      $region31: #{frozen_batch_norm_act_2d.1} parent=27 // pred_region
        _
      $region32: #{frozen_batch_norm_act_2d.1} parent=27 // pred_fallthru
        _
    $region28: #{frozen_batch_norm_act_2d.1} parent=5 // pred_fallthru
      _
    %p218 = scmp.le.s32.totalorder 2, %s8
    // Predicated region
    $region33: #{frozen_batch_norm_act_2d.1} parent=5 // pred_check
      %p219 = pneg %p218
    $region34: #{frozen_batch_norm_act_2d.1} parent=5 // pred_check_branch
      %221 = sbr.rel (%p219) target = $region36
    $region35: #{frozen_batch_norm_act_2d.1} parent=5 // pred_region
      %s222 = ssub.s32 %s8, 2
      // Predicated region
      $region37: #{frozen_batch_norm_act_2d.1} parent=35 // pred_check
        %p223 = pneg %p105
      $region38: #{frozen_batch_norm_act_2d.1} parent=35 // pred_check_branch
        %225 = sbr.rel (%p223) target = $region40
      $region39: #{frozen_batch_norm_act_2d.1} parent=35 // pred_region
        %p226 = scmp.lt.s32.totalorder %s19, 0
        %s227 = scalar_select %p226, %s19, 0
        %p228 = scmp.lt.s32.totalorder %s20, 1
        %s229 = scalar_select %p228, %s20, 1
        %s230 = smul.addr %s227, 2
        %s231 = sadd.s32 %s229, %s230
        %s232 = smul.addr %s231, 8
        %s233 = scalar_lea.vmem %s2, %s232
      $region40: #{frozen_batch_norm_act_2d.1} parent=35 // pred_fallthru
        _
    $region36: #{frozen_batch_norm_act_2d.1} parent=5 // pred_fallthru
      _
  $region6: #{frozen_batch_norm_act_2d.1} parent=0 // loop_footer
    %s12 = sadd.s32 1, %s8
  $region7: #{frozen_batch_norm_act_2d.1} parent=0 // loop_footer_branch
    %7 = sbr.rel target = $region3
  $region8: #{frozen_batch_norm_act_2d.1} parent=0 // loop_exit
    _

</llo_original>
